<compile_context>
chip_gen: v5e
topology: v5e:2x2
jax: 0.10.0
libtpu: 0.0.40
codegen_flags: <defaults>
</compile_context>

<pallas_src>
import jax
import jax.numpy as jnp
from jax.experimental import pallas as pl
from jax.experimental.pallas import tpu as pltpu


def _tanh_kernel(x_ref, o_ref):
    # Elementwise tanh on the current VMEM tile (EUP transcendental path).
    o_ref[...] = jnp.tanh(x_ref[...])


def _pick_lane_width(n):
    # Prefer a lane-dense width that divides n exactly (avoids any pad copy).
    for w in (1024, 512, 256, 128):
        if n % w == 0:
            return w, False
    return 512, True


def tanh_pallas(x, *, block_bytes=4 << 20, small_threshold=1 << 16):
    """Elementwise tanh via a Pallas TPU kernel. Matches torch.tanh(x)."""
    orig_shape = x.shape
    dtype = x.dtype
    n = x.size

    if n == 0:
        return x

    # Tiny activations: a standalone pallas_call is pure launch overhead and
    # prevents fusion with neighbouring matmuls; let XLA handle them.
    if n < small_threshold:
        return jnp.tanh(x)

    itemsize = jnp.dtype(dtype).itemsize
    sublane = max(8, 32 // itemsize)          # 8 (f32) / 16 (bf16) / 32 (int8)

    lane_w, needs_pad = _pick_lane_width(n)
    flat = x.reshape(-1)
    pad = (-n) % lane_w if needs_pad else 0
    if pad:
        flat = jnp.pad(flat, (0, pad))        # tail-only pad (< lane_w elems)
    rows = (n + pad) // lane_w
    x2 = flat.reshape(rows, lane_w)

    # Row tile from the VMEM budget: 2 buffers x (in + out) = 4x block bytes.
    tr = max(sublane, block_bytes // (lane_w * itemsize))
    tr = min(tr, rows)
    tr = max(sublane, (tr // sublane) * sublane)        # sublane-aligned
    # Ensure at least 2 grid steps when possible (v7x has 2 TensorCores).
    if rows >= 2 * sublane:
        half = (-(-((rows + 1) // 2) // sublane)) * sublane
        tr = min(tr, half)

    grid = (pl.cdiv(rows, tr),)   # ragged last block: masked by Pallas, safe here

    out = pl.pallas_call(
        _tanh_kernel,
        out_shape=jax.ShapeDtypeStruct((rows, lane_w), dtype),
        grid_spec=pltpu.PrefetchScalarGridSpec(
            num_scalar_prefetch=0,
            grid=grid,
            in_specs=[pl.BlockSpec((tr, lane_w), lambda i: (i, 0))],
            out_specs=pl.BlockSpec((tr, lane_w), lambda i: (i, 0)),
        ),
        compiler_params=pltpu.CompilerParams(
            dimension_semantics=("parallel",),
            # ~16 MiB resident; 32 MiB scoped gives headroom on v5e's 16 MiB
            # default and stays well under v7x's 64 MiB physical VMEM.
            vmem_limit_bytes=32 << 20,
        ),
    )(x2)

    out_flat = out.reshape(-1)
    if pad:
        out_flat = out_flat[:n]
    return out_flat.reshape(orig_shape)


if __name__ == "__main__":
    key = jax.random.PRNGKey(0)
    k1, k2, k3 = jax.random.split(key, 3)

    # 1) RNN-sized activation (seq=8, hidden=32): fused jnp.tanh fast path.
    x_small = jax.random.normal(k1, (8, 32), dtype=jnp.float32)
    # 2) Lane-aligned activation: exercises the Pallas path with no padding.
    x_aligned = jax.random.normal(k2, (16, 64, 128), dtype=jnp.float32)
    # 3) Deliberately non-128-aligned element count: exercises tail pad +
    #    ragged last row block.
    x_ragged = jax.random.normal(k3, (257, 260), dtype=jnp.float32)

    results = []
    for x in (x_small, x_aligned, x_ragged):
        y = tanh_pallas(x)
        results.append((x, y))
    jax.block_until_ready([y for _, y in results])

    for x, y in results:
        y_ref = jnp.tanh(x)
        assert y.shape == x.shape and y.dtype == x.dtype
        assert jnp.allclose(y, y_ref, atol=1e-5, rtol=1e-5)

    # TODO(synk): TanhFunction.backward (grad_output * (1 - tanh(x)**2)) is an
    # autograd rule, not part of the forward pass; not implemented here.
    print("KERNEL_OK")
</pallas_src>

<mosaic_0001>
module attributes {stable_mosaic.version = 11 : i64} {
  func.func @_tanh_kernel(%arg0: i32, %arg1: memref<64x1024xf32, #tpu.memory_space<vmem>>, %arg2: memref<64x1024xf32, #tpu.memory_space<vmem>>) attributes {dimension_semantics = [#tpu.dimension_semantics<parallel>], iteration_bounds = array<i64: 2>, scalar_prefetch = 0 : i64, scratch_operands = 0 : i64, tpu.core_type = #tpu.core_type<tc>, window_params = [{transform_indices = @transform_0, window_bounds = array<i64: 64, 1024>}, {transform_indices = @transform_1, window_bounds = array<i64: 64, 1024>}]} {
    %c0 = arith.constant 0 : index
    %c0_0 = arith.constant 0 : index
    %0 = vector.load %arg1[%c0, %c0_0] : memref<64x1024xf32, #tpu.memory_space<vmem>>, vector<64x1024xf32>
    %1 = math.tanh %0 : vector<64x1024xf32>
    %c0_1 = arith.constant 0 : index
    %c0_2 = arith.constant 0 : index
    %2 = vector.load %arg2[%c0_1, %c0_2] : memref<64x1024xf32, #tpu.memory_space<vmem>>, vector<64x1024xf32>
    tpu.vector_store %arg2[%c0_1, %c0_2], %1 {strides = array<i32>} : memref<64x1024xf32, #tpu.memory_space<vmem>>, vector<64x1024xf32>,
    return
  }
  func.func @transform_0(%arg0: i32) -> (i32, i32) {
    %c0_i32 = arith.constant 0 : i32
    %c0_i32_0 = arith.constant 0 : i32
    return %arg0, %c0_i32 : i32, i32
  }
  func.func @transform_1(%arg0: i32) -> (i32, i32) {
    %c0_i32 = arith.constant 0 : i32
    %c0_i32_0 = arith.constant 0 : i32
    return %arg0, %c0_i32 : i32, i32
  }
}

</mosaic_0001>

<llo_original>
// kernel: tpu_custom_call.1
$region0: #{tpu_custom_call.1}
  #allocation0 [shape = 'u32[]', space=smem, size = 0x4, offset = 0x4, fixed_abs, tag = 'smem constant byte address 0x4 - core index']
  #allocation1 [shape = 'u32[72,128]{1,0:T(1,128)}', space=vmem, size = 0x9000, scoped, tag = 'internal scratch']
  %s0 = inlined_call_operand.hbm [shape: f32[128,1024], index: 0, kind: input, shape index: {}]
  %s1 = inlined_call_operand.hbm [shape: f32[128,1024], index: 1, kind: output, shape index: {}]
  %s2 = sld [smem:[#allocation0]]
  $region41: #{tpu_custom_call.1} parent=0
    _
  %s4 = ssub.s32 1, %s2
  %s5 = scalar_select 0, %s4, %s2
  $region1: #{tpu_custom_call.1} parent=0
    #allocation2 [shape = 'u8[524288]{0}', space=vmem, size = 0x80000, scoped, tag = 'input window, operand 0']
    #allocation3 [shape = 's32[2]{0}', space=sflag, size = 0x8, scoped, tag = 'scoped memory for tpu_custom_call.1']
    #allocation4 [shape = 's32[2]{0}', space=sflag, size = 0x8, scoped, tag = 'scoped memory for tpu_custom_call.1']
    #allocation5 [shape = 'u8[524288]{0}', space=vmem, size = 0x80000, scoped, tag = 'output window, operand 0']
    %6 = vsyncpa [#allocation3], 0
    %s7 = scalar_lea.sflag [#allocation3], 1
    %8 = vsyncpa %s7, 0
    %9 = vsyncpa [#allocation4], 0
    %s10 = scalar_lea.sflag [#allocation4], 1
    %11 = vsyncpa %s10, 0
    loop: start=0, step=1, limit=4
    $region2: #{tpu_custom_call.1} parent=1 // loop_pre_header
      _
    $region3: #{tpu_custom_call.1} parent=1 // loop_header
      %s13 = sphi 0, %s17
      %p14 = scmp.ge.s32.totalorder %s13, 4
      %s23 = sphi 0, %s25
      %s26 = sphi 0, %s23
      %s27 = sphi 0, %s26
      %s43 = sphi 0, %s27
      %s49 = sphi 0, %s51
      %s52 = sphi 0, %s49
      %s53 = sphi 0, %s52
      %s69 = sphi 0, %s53
    $region4: #{tpu_custom_call.1} parent=1 // loop_header_branch
      %16 = sbr.rel (%p14) target = $region8
    $region5: #{tpu_custom_call.1} parent=1 // loop_body
      %s18 = ssub.s32 %s13, 1
      %s19 = ssub.s32 %s13, 2
      %s20 = sadd.s32 %s13, 1
      %s21 = ssub.s32 %s13, %s20
      %p22 = scmp.eq.s32.totalorder %s21, 0
      %s24 = sadd.s32 %s23, 1
      %s25 = scalar_select %p22, %s23, %s24
      %p28 = pneg %p22
      %p29 = scmp.eq.s32.totalorder %s13, 1
      %p30 = por %p28, %p29
      %p31 = scmp.ne.s32.totalorder %s23, %s26
      %p32 = scmp.eq.s32.totalorder %s13, 0
      %p33 = por %p31, %p32
      %p34 = scmp.ne.s32.totalorder %s23, %s26
      %p35 = scmp.eq.s32.totalorder %s18, 1
      %p36 = por %p34, %p35
      %p37 = scmp.ne.s32.totalorder %s26, %s27
      %p38 = scmp.eq.s32.totalorder %s18, 0
      %p39 = por %p37, %p38
      %p40 = scmp.ne.s32.totalorder %s26, %s27
      %p41 = scmp.eq.s32.totalorder %s19, 1
      %p42 = por %p40, %p41
      %p44 = scmp.ne.s32.totalorder %s27, %s43
      %p45 = scmp.eq.s32.totalorder %s19, 0
      %p46 = por %p44, %p45
      %s47 = ssub.s32 %s13, %s20
      %p48 = scmp.eq.s32.totalorder %s47, 0
      %s50 = sadd.s32 %s49, 1
      %s51 = scalar_select %p48, %s49, %s50
      %p54 = pneg %p48
      %p55 = scmp.eq.s32.totalorder %s13, 1
      %p56 = por %p54, %p55
      %p57 = scmp.ne.s32.totalorder %s49, %s52
      %p58 = scmp.eq.s32.totalorder %s13, 0
      %p59 = por %p57, %p58
      %p60 = scmp.ne.s32.totalorder %s49, %s52
      %p61 = scmp.eq.s32.totalorder %s18, 1
      %p62 = por %p60, %p61
      %p63 = scmp.ne.s32.totalorder %s52, %s53
      %p64 = scmp.eq.s32.totalorder %s18, 0
      %p65 = por %p63, %p64
      %p66 = scmp.ne.s32.totalorder %s52, %s53
      %p67 = scmp.eq.s32.totalorder %s19, 1
      %p68 = por %p66, %p67
      %p70 = scmp.ne.s32.totalorder %s53, %s69
      %p71 = scmp.eq.s32.totalorder %s19, 0
      %p72 = por %p70, %p71
      %p73 = scmp.le.s32.totalorder 1, %s13
      %p74 = scmp.lt.s32.totalorder %s13, 3
      %p75 = pnand %p73, %p74
      %p76 = pneg %p75
      // Predicated region
      $region9: #{tpu_custom_call.1} parent=5 // pred_check
        _
      $region10: #{tpu_custom_call.1} parent=5 // pred_check_branch
        %78 = sbr.rel (%p75) target = $region12
      $region11: #{tpu_custom_call.1} parent=5 // pred_region
        %s79 = ssub.s32 %s13, 1
      $region12: #{tpu_custom_call.1} parent=5 // pred_fallthru
        _
      %p80 = scmp.lt.s32.totalorder %s13, 2
      // Predicated region
      $region13: #{tpu_custom_call.1} parent=5 // pred_check
        %p81 = pneg %p80
      $region14: #{tpu_custom_call.1} parent=5 // pred_check_branch
        %83 = sbr.rel (%p81) target = $region16
      $region15: #{tpu_custom_call.1} parent=5 // pred_region
        // Predicated region
        $region17: #{tpu_custom_call.1} parent=15 // pred_check
          %p84 = pneg %p33
        $region18: #{tpu_custom_call.1} parent=15 // pred_check_branch
          %86 = sbr.rel (%p84) target = $region20
        $region19: #{tpu_custom_call.1} parent=15 // pred_region
          %s87 = sand.u32 %s23, 1
          %s88 = scalar_lea.sflag [#allocation3], %s87
          %s89 = sand.u32 %s23, 1
          %s90 = smul.addr %s89, 512
          %s91 = scalar_lea.vmem [#allocation2], %s90
          %s92 = smul.u32 8, %s13
          %94 = vsyncadd %s88, 0
          %s95 = smul.addr %s92, 8
          %s96 = smul.addr %s95, 8
          %s97 = scalar_lea.hbm %s0, %s96
          %s98 = sshll.u32 %s97, 4
          %s99 = int_to_ptr.hbm [resolvable:$true] %s98
          %s100 = sshll.u32 %s91, 4
          %s101 = int_to_ptr.vmem [resolvable:$true] %s100
          %106 = dma.hbm_to_vmem [thread:$0]  %s99, 8192, %s101, %s88, 1024, 1024, 64
        $region20: #{tpu_custom_call.1} parent=15 // pred_fallthru
          _
      $region16: #{tpu_custom_call.1} parent=5 // pred_fallthru
        _
      %p107 = scmp.le.s32.totalorder 1, %s13
      %p108 = scmp.lt.s32.totalorder %s13, 3
      %p109 = pnand %p107, %p108
      %p110 = pneg %p109
      // Predicated region
      $region21: #{tpu_custom_call.1} parent=5 // pred_check
        _
      $region22: #{tpu_custom_call.1} parent=5 // pred_check_branch
        %112 = sbr.rel (%p109) target = $region24
      $region23: #{tpu_custom_call.1} parent=5 // pred_region
        %s113 = ssub.s32 %s13, 1
        %s114 = sand.u32 %s26, 1
        %s115 = scalar_lea.sflag [#allocation3], %s114
        %s116 = sand.u32 %s26, 1
        %s117 = smul.addr %s116, 512
        %s118 = scalar_lea.vmem [#allocation2], %s117
        // Predicated region
        $region25: #{tpu_custom_call.1} parent=23 // pred_check
          %p119 = pneg %p39
        $region26: #{tpu_custom_call.1} parent=23 // pred_check_branch
          %121 = sbr.rel (%p119) target = $region28
        $region27: #{tpu_custom_call.1} parent=23 // pred_region
          %123 = dma.done %s115, 8192
        $region28: #{tpu_custom_call.1} parent=23 // pred_fallthru
          _
        %s124 = sand.u32 %s26, 1
        %s125 = scalar_lea.sflag [#allocation3], %s124
        %s126 = sand.u32 %s26, 1
        %s127 = smul.addr %s126, 512
        %s128 = scalar_lea.vmem [#allocation2], %s127
        %p129 = pneg %p39
        %p130 = pneg %p36
        %p131 = pneg %p65
        %p132 = pneg %p62
        %s133 = sand.u32 %s52, 1
        %s134 = scalar_lea.sflag [#allocation4], %s133
        %s135 = sand.u32 %s52, 1
        %s136 = smul.addr %s135, 512
        %s137 = scalar_lea.vmem [#allocation5], %s136
        %s138 = smul.u32 8, %s18
        %s139 = smul.u32 8, %s18
        %v140 = vld [vmem:[%s118] sm:$0xff]
        %v141 = vld [vmem:[%s118 + $0x8] sm:$0xff]
        %v142 = vld [vmem:[%s118 + $0x10] sm:$0xff]
        %v143 = vld [vmem:[%s118 + $0x18] sm:$0xff]
        %v144 = vld [vmem:[%s118 + $0x20] sm:$0xff]
        %v145 = vld [vmem:[%s118 + $0x28] sm:$0xff]
        %v146 = vld [vmem:[%s118 + $0x30] sm:$0xff]
        %v147 = vld [vmem:[%s118 + $0x38] sm:$0xff]
        %v148 = vld [vmem:[%s118 + $0x40] sm:$0xff]
        %v149 = vld [vmem:[%s118 + $0x48] sm:$0xff]
        %v150 = vld [vmem:[%s118 + $0x50] sm:$0xff]
        %v151 = vld [vmem:[%s118 + $0x58] sm:$0xff]
        %v152 = vld [vmem:[%s118 + $0x60] sm:$0xff]
        %v153 = vld [vmem:[%s118 + $0x68] sm:$0xff]
        %v154 = vld [vmem:[%s118 + $0x70] sm:$0xff]
        %v155 = vld [vmem:[%s118 + $0x78] sm:$0xff]
        %v156 = vld [vmem:[%s118 + $0x80] sm:$0xff]
        %v157 = vld [vmem:[%s118 + $0x88] sm:$0xff]
        %v158 = vld [vmem:[%s118 + $0x90] sm:$0xff]
        %v159 = vld [vmem:[%s118 + $0x98] sm:$0xff]
        %v160 = vld [vmem:[%s118 + $0xa0] sm:$0xff]
        %v161 = vld [vmem:[%s118 + $0xa8] sm:$0xff]
        %v162 = vld [vmem:[%s118 + $0xb0] sm:$0xff]
        %v163 = vld [vmem:[%s118 + $0xb8] sm:$0xff]
        %v164 = vld [vmem:[%s118 + $0xc0] sm:$0xff]
        %v165 = vld [vmem:[%s118 + $0xc8] sm:$0xff]
        %v166 = vld [vmem:[%s118 + $0xd0] sm:$0xff]
        %v167 = vld [vmem:[%s118 + $0xd8] sm:$0xff]
        %v168 = vld [vmem:[%s118 + $0xe0] sm:$0xff]
        %v169 = vld [vmem:[%s118 + $0xe8] sm:$0xff]
        %v170 = vld [vmem:[%s118 + $0xf0] sm:$0xff]
        %v171 = vld [vmem:[%s118 + $0xf8] sm:$0xff]
        %v172 = vld [vmem:[%s118 + $0x100] sm:$0xff]
        %v173 = vld [vmem:[%s118 + $0x108] sm:$0xff]
        %v174 = vld [vmem:[%s118 + $0x110] sm:$0xff]
        %v175 = vld [vmem:[%s118 + $0x118] sm:$0xff]
        %v176 = vld [vmem:[%s118 + $0x120] sm:$0xff]
        %v177 = vld [vmem:[%s118 + $0x128] sm:$0xff]
        %v178 = vld [vmem:[%s118 + $0x130] sm:$0xff]
        %v179 = vld [vmem:[%s118 + $0x138] sm:$0xff]
        %v180 = vld [vmem:[%s118 + $0x140] sm:$0xff]
        %v181 = vld [vmem:[%s118 + $0x148] sm:$0xff]
        %v182 = vld [vmem:[%s118 + $0x150] sm:$0xff]
        %v183 = vld [vmem:[%s118 + $0x158] sm:$0xff]
        %v184 = vld [vmem:[%s118 + $0x160] sm:$0xff]
        %v185 = vld [vmem:[%s118 + $0x168] sm:$0xff]
        %v186 = vld [vmem:[%s118 + $0x170] sm:$0xff]
        %v187 = vld [vmem:[%s118 + $0x178] sm:$0xff]
        %v188 = vld [vmem:[%s118 + $0x180] sm:$0xff]
        %v189 = vld [vmem:[%s118 + $0x188] sm:$0xff]
        %v190 = vld [vmem:[%s118 + $0x190] sm:$0xff]
        %v191 = vld [vmem:[%s118 + $0x198] sm:$0xff]
        %v192 = vld [vmem:[%s118 + $0x1a0] sm:$0xff]
        %v193 = vld [vmem:[%s118 + $0x1a8] sm:$0xff]
        %v194 = vld [vmem:[%s118 + $0x1b0] sm:$0xff]
        %v195 = vld [vmem:[%s118 + $0x1b8] sm:$0xff]
        %v196 = vld [vmem:[%s118 + $0x1c0] sm:$0xff]
        %v197 = vld [vmem:[%s118 + $0x1c8] sm:$0xff]
        %v198 = vld [vmem:[%s118 + $0x1d0] sm:$0xff]
        %v199 = vld [vmem:[%s118 + $0x1d8] sm:$0xff]
        %v200 = vld [vmem:[%s118 + $0x1e0] sm:$0xff]
        %v201 = vld [vmem:[%s118 + $0x1e8] sm:$0xff]
        %v202 = vld [vmem:[%s118 + $0x1f0] sm:$0xff]
        %v203 = vld [vmem:[%s118 + $0x1f8] sm:$0xff]
        %v204 = vtanh.pop %v140
        %v205 = vtanh.pop %v141
        %v206 = vtanh.pop %v142
        %v207 = vtanh.pop %v143
        %v208 = vtanh.pop %v144
        %v209 = vtanh.pop %v145
        %v210 = vtanh.pop %v146
        %v211 = vtanh.pop %v147
        %v212 = vtanh.pop %v148
        %v213 = vtanh.pop %v149
        %v214 = vtanh.pop %v150
        %v215 = vtanh.pop %v151
        %v216 = vtanh.pop %v152
        %v217 = vtanh.pop %v153
        %v218 = vtanh.pop %v154
        %v219 = vtanh.pop %v155
        %v220 = vtanh.pop %v156
        %v221 = vtanh.pop %v157
        %v222 = vtanh.pop %v158
        %v223 = vtanh.pop %v159
        %v224 = vtanh.pop %v160
        %v225 = vtanh.pop %v161
        %v226 = vtanh.pop %v162
        %v227 = vtanh.pop %v163
        %v228 = vtanh.pop %v164
        %v229 = vtanh.pop %v165
        %v230 = vtanh.pop %v166
        %v231 = vtanh.pop %v167
        %v232 = vtanh.pop %v168
        %v233 = vtanh.pop %v169
        %v234 = vtanh.pop %v170
        %v235 = vtanh.pop %v171
        %v236 = vtanh.pop %v172
        %v237 = vtanh.pop %v173
        %v238 = vtanh.pop %v174
        %v239 = vtanh.pop %v175
        %v240 = vtanh.pop %v176
        %v241 = vtanh.pop %v177
        %v242 = vtanh.pop %v178
        %v243 = vtanh.pop %v179
        %v244 = vtanh.pop %v180
        %v245 = vtanh.pop %v181
        %v246 = vtanh.pop %v182
        %v247 = vtanh.pop %v183
        %v248 = vtanh.pop %v184
        %v249 = vtanh.pop %v185
        %v250 = vtanh.pop %v186
        %v251 = vtanh.pop %v187
        %v252 = vtanh.pop %v188
        %v253 = vtanh.pop %v189
        %v254 = vtanh.pop %v190
        %v255 = vtanh.pop %v191
        %v256 = vtanh.pop %v192
        %v257 = vtanh.pop %v193
        %v258 = vtanh.pop %v194
        %v259 = vtanh.pop %v195
        %v260 = vtanh.pop %v196
        %v261 = vtanh.pop %v197
        %v262 = vtanh.pop %v198
        %v263 = vtanh.pop %v199
        %v264 = vtanh.pop %v200
        %v265 = vtanh.pop %v201
        %v266 = vtanh.pop %v202
        %v267 = vtanh.pop %v203
        %268 = vst [vmem:[%s137] sm:$0xff] %v204
        %269 = vst [vmem:[%s137 + $0x8] sm:$0xff] %v205
        %270 = vst [vmem:[%s137 + $0x10] sm:$0xff] %v206
        %271 = vst [vmem:[%s137 + $0x18] sm:$0xff] %v207
        %272 = vst [vmem:[%s137 + $0x20] sm:$0xff] %v208
        %273 = vst [vmem:[%s137 + $0x28] sm:$0xff] %v209
        %274 = vst [vmem:[%s137 + $0x30] sm:$0xff] %v210
        %275 = vst [vmem:[%s137 + $0x38] sm:$0xff] %v211
        %276 = vst [vmem:[%s137 + $0x40] sm:$0xff] %v212
        %277 = vst [vmem:[%s137 + $0x48] sm:$0xff] %v213
        %278 = vst [vmem:[%s137 + $0x50] sm:$0xff] %v214
        %279 = vst [vmem:[%s137 + $0x58] sm:$0xff] %v215
        %280 = vst [vmem:[%s137 + $0x60] sm:$0xff] %v216
        %281 = vst [vmem:[%s137 + $0x68] sm:$0xff] %v217
        %282 = vst [vmem:[%s137 + $0x70] sm:$0xff] %v218
        %283 = vst [vmem:[%s137 + $0x78] sm:$0xff] %v219
        %284 = vst [vmem:[%s137 + $0x80] sm:$0xff] %v220
        %285 = vst [vmem:[%s137 + $0x88] sm:$0xff] %v221
        %286 = vst [vmem:[%s137 + $0x90] sm:$0xff] %v222
        %287 = vst [vmem:[%s137 + $0x98] sm:$0xff] %v223
        %288 = vst [vmem:[%s137 + $0xa0] sm:$0xff] %v224
        %289 = vst [vmem:[%s137 + $0xa8] sm:$0xff] %v225
        %290 = vst [vmem:[%s137 + $0xb0] sm:$0xff] %v226
        %291 = vst [vmem:[%s137 + $0xb8] sm:$0xff] %v227
        %292 = vst [vmem:[%s137 + $0xc0] sm:$0xff] %v228
        %293 = vst [vmem:[%s137 + $0xc8] sm:$0xff] %v229
        %294 = vst [vmem:[%s137 + $0xd0] sm:$0xff] %v230
        %295 = vst [vmem:[%s137 + $0xd8] sm:$0xff] %v231
        %296 = vst [vmem:[%s137 + $0xe0] sm:$0xff] %v232
        %297 = vst [vmem:[%s137 + $0xe8] sm:$0xff] %v233
        %298 = vst [vmem:[%s137 + $0xf0] sm:$0xff] %v234
        %299 = vst [vmem:[%s137 + $0xf8] sm:$0xff] %v235
        %300 = vst [vmem:[%s137 + $0x100] sm:$0xff] %v236
        %301 = vst [vmem:[%s137 + $0x108] sm:$0xff] %v237
        %302 = vst [vmem:[%s137 + $0x110] sm:$0xff] %v238
        %303 = vst [vmem:[%s137 + $0x118] sm:$0xff] %v239
        %304 = vst [vmem:[%s137 + $0x120] sm:$0xff] %v240
        %305 = vst [vmem:[%s137 + $0x128] sm:$0xff] %v241
        %306 = vst [vmem:[%s137 + $0x130] sm:$0xff] %v242
        %307 = vst [vmem:[%s137 + $0x138] sm:$0xff] %v243
        %308 = vst [vmem:[%s137 + $0x140] sm:$0xff] %v244
        %309 = vst [vmem:[%s137 + $0x148] sm:$0xff] %v245
        %310 = vst [vmem:[%s137 + $0x150] sm:$0xff] %v246
        %311 = vst [vmem:[%s137 + $0x158] sm:$0xff] %v247
        %312 = vst [vmem:[%s137 + $0x160] sm:$0xff] %v248
        %313 = vst [vmem:[%s137 + $0x168] sm:$0xff] %v249
        %314 = vst [vmem:[%s137 + $0x170] sm:$0xff] %v250
        %315 = vst [vmem:[%s137 + $0x178] sm:$0xff] %v251
        %316 = vst [vmem:[%s137 + $0x180] sm:$0xff] %v252
        %317 = vst [vmem:[%s137 + $0x188] sm:$0xff] %v253
        %318 = vst [vmem:[%s137 + $0x190] sm:$0xff] %v254
        %319 = vst [vmem:[%s137 + $0x198] sm:$0xff] %v255
        %320 = vst [vmem:[%s137 + $0x1a0] sm:$0xff] %v256
        %321 = vst [vmem:[%s137 + $0x1a8] sm:$0xff] %v257
        %322 = vst [vmem:[%s137 + $0x1b0] sm:$0xff] %v258
        %323 = vst [vmem:[%s137 + $0x1b8] sm:$0xff] %v259
        %324 = vst [vmem:[%s137 + $0x1c0] sm:$0xff] %v260
        %325 = vst [vmem:[%s137 + $0x1c8] sm:$0xff] %v261
        %326 = vst [vmem:[%s137 + $0x1d0] sm:$0xff] %v262
        %327 = vst [vmem:[%s137 + $0x1d8] sm:$0xff] %v263
        %328 = vst [vmem:[%s137 + $0x1e0] sm:$0xff] %v264
        %329 = vst [vmem:[%s137 + $0x1e8] sm:$0xff] %v265
        %330 = vst [vmem:[%s137 + $0x1f0] sm:$0xff] %v266
        %331 = vst [vmem:[%s137 + $0x1f8] sm:$0xff] %v267
        %s332 = sand.u32 %s52, 1
        %s333 = scalar_lea.sflag [#allocation4], %s332
        %s334 = sand.u32 %s52, 1
        %s335 = smul.addr %s334, 512
        %s336 = scalar_lea.vmem [#allocation5], %s335
        // Predicated region
        $region29: #{tpu_custom_call.1} parent=23 // pred_check
          %p337 = pneg %p62
        $region30: #{tpu_custom_call.1} parent=23 // pred_check_branch
          %339 = sbr.rel (%p337) target = $region32
        $region31: #{tpu_custom_call.1} parent=23 // pred_region
          %s340 = smul.u32 8, %s18
          %342 = vsyncadd %s333, 0
          %s343 = smul.addr %s340, 8
          %s344 = smul.addr %s343, 8
          %s345 = scalar_lea.hbm %s1, %s344
          %s346 = sshll.u32 %s336, 4
          %s347 = int_to_ptr.vmem [resolvable:$true] %s346
          %s348 = sshll.u32 %s345, 4
          %s349 = int_to_ptr.hbm [resolvable:$true] %s348
          %354 = dma.vmem_to_hbm [thread:$0]  %s347, 8192, %s349, %s333, 1024, 1024, 64
        $region32: #{tpu_custom_call.1} parent=23 // pred_fallthru
          _
      $region24: #{tpu_custom_call.1} parent=5 // pred_fallthru
        _
      %p355 = scmp.le.s32.totalorder 2, %s13
      // Predicated region
      $region33: #{tpu_custom_call.1} parent=5 // pred_check
        %p356 = pneg %p355
      $region34: #{tpu_custom_call.1} parent=5 // pred_check_branch
        %358 = sbr.rel (%p356) target = $region36
      $region35: #{tpu_custom_call.1} parent=5 // pred_region
        %s359 = ssub.s32 %s13, 2
        // Predicated region
        $region37: #{tpu_custom_call.1} parent=35 // pred_check
          %p360 = pneg %p68
        $region38: #{tpu_custom_call.1} parent=35 // pred_check_branch
          %362 = sbr.rel (%p360) target = $region40
        $region39: #{tpu_custom_call.1} parent=35 // pred_region
          %s363 = sand.u32 %s53, 1
          %s364 = scalar_lea.sflag [#allocation4], %s363
          %s365 = sand.u32 %s53, 1
          %s366 = smul.addr %s365, 512
          %s367 = scalar_lea.vmem [#allocation5], %s366
          %369 = dma.done %s364, 8192
        $region40: #{tpu_custom_call.1} parent=35 // pred_fallthru
          _
      $region36: #{tpu_custom_call.1} parent=5 // pred_fallthru
        _
    $region6: #{tpu_custom_call.1} parent=1 // loop_footer
      %s17 = sadd.s32 1, %s13
    $region7: #{tpu_custom_call.1} parent=1 // loop_footer_branch
      %12 = sbr.rel target = $region3
    $region8: #{tpu_custom_call.1} parent=1 // loop_exit
      _
    %370 = vsyncpa [#allocation3], 1
    %s371 = scalar_lea.sflag [#allocation3], 1
    %372 = vsyncpa %s371, 1
    %373 = vsyncpa [#allocation4], 1
    %s374 = scalar_lea.sflag [#allocation4], 1
    %375 = vsyncpa %s374, 1

</llo_original>
